<compile_context>
chip_gen: v7x
topology: tpu7x:2x2x1
jax: 0.10.0
libtpu: 0.0.40
codegen_flags: <defaults>
</compile_context>

<pallas_src>
import math

import jax
import jax.numpy as jnp
from jax.experimental import pallas as pl
from jax.experimental.pallas import tpu as pltpu


def _round_up(x, m):
    return ((x + m - 1) // m) * m


def _gplayer_kernel(kcinv_ref, y_ref, z_ref):
    # kcinv_ref: (L, L)   — same block for every N-tile of a batch element
    # y_ref:     (L, TN)  — native dtype (f32 or bf16)
    # z_ref:     (L, TN)  f32
    z = jnp.dot(kcinv_ref[...], y_ref[...], preferred_element_type=jnp.float32)
    z_ref[...] = jnp.maximum(z, 0.0)


def gplayer_forward(D, Y, gamma2, ell, sigma2, *, tn=32768):
    """D: (B, L, L); Y: (B, L, C, H, W). Returns Z: (B, L, C*H*W) float32."""
    B, L, Cc, H, W = Y.shape
    N = Cc * H * W
    Yf = Y.reshape(B, L, N)                 # view-style reshape, keep native dtype
    Df = D.astype(jnp.float32)

    # --- tiny (L x L) GP algebra hoisted into the wrapper -------------------
    g2 = jnp.exp(gamma2).astype(jnp.float32)       # exp(gamma2)
    inv_ell = jnp.exp(-ell).astype(jnp.float32)    # 1 / exp(ell)
    s2 = jnp.exp(sigma2).astype(jnp.float32)       # exp(sigma2)
    scaled = (math.sqrt(3.0) * Df) * inv_ell
    K = g2 * (1.0 + scaled) * jnp.exp(-scaled)                     # (B, L, L)
    C = K + s2 * jnp.eye(L, dtype=jnp.float32)
    # K @ C^{-1} without forming the inverse:  X = K C^{-1}  <=>  C^T X^T = K^T
    KCinv = jnp.swapaxes(
        jnp.linalg.solve(jnp.swapaxes(C, -1, -2), jnp.swapaxes(K, -1, -2)),
        -1, -2).astype(jnp.float32)
    if Yf.dtype != jnp.float32:
        # Match MXU operand dtypes (e.g. bf16 LHS/RHS, f32 accumulation).
        KCinv = KCinv.astype(Yf.dtype)

    # --- lane-dense tiling over N (no pad / slice of the big tensor) --------
    itemsize_y = jnp.dtype(Yf.dtype).itemsize
    tn_eff = max(128, (min(int(tn), _round_up(N, 128)) // 128) * 128)
    # Keep double-buffered Y+Z blocks well under every generation's scoped
    # VMEM default (v5e ~16 MiB) and v7x's 64 MiB physical VMEM.
    vmem_budget = 12 * 1024 * 1024
    tn_cap = max(128, (vmem_budget // (2 * L * (itemsize_y + 4)) // 128) * 128)
    tn_eff = min(tn_eff, tn_cap)
    n_tiles = pl.cdiv(N, tn_eff)
    # Keep >=2 grid steps so v7x's second TensorCore isn't idled.
    if B * n_tiles < 2 and N > 128:
        tn_eff = _round_up(pl.cdiv(N, 2), 128)
        n_tiles = pl.cdiv(N, tn_eff)

    cost = pl.CostEstimate(
        flops=2 * B * L * L * N,
        transcendentals=0,
        bytes_accessed=B * L * N * (itemsize_y + 4) + B * L * L * KCinv.dtype.itemsize,
    )

    Z = pl.pallas_call(
        _gplayer_kernel,
        out_shape=jax.ShapeDtypeStruct((B, L, N), jnp.float32),
        grid=(B, n_tiles),
        in_specs=[
            pl.BlockSpec((None, L, L), lambda b, n: (b, 0, 0)),        # KCinv
            pl.BlockSpec((None, L, tn_eff), lambda b, n: (b, 0, n)),   # Y tile
        ],
        out_specs=pl.BlockSpec((None, L, tn_eff), lambda b, n: (b, 0, n)),
        compiler_params=pltpu.CompilerParams(
            dimension_semantics=("parallel", "parallel")),
        cost_estimate=cost,
    )(KCinv, Yf)
    return Z


def _reference(D, Y, gamma2, ell, sigma2):
    B, L = Y.shape[0], Y.shape[1]
    Yf = Y.reshape(B, L, -1).astype(jnp.float32)
    Df = D.astype(jnp.float32)
    K = jnp.exp(gamma2) * (1.0 + math.sqrt(3.0) * Df / jnp.exp(ell)) \
        * jnp.exp(-math.sqrt(3.0) * Df / jnp.exp(ell))
    I = jnp.broadcast_to(jnp.eye(L, dtype=jnp.float32), (B, L, L))
    C = K + jnp.exp(sigma2) * I
    Cinv = jnp.linalg.inv(C)
    Z = jnp.einsum("bij,bjk,bkn->bin", K, Cinv, Yf)
    return jnp.maximum(Z, 0.0)


if __name__ == "__main__":
    key = jax.random.PRNGKey(0)
    k_t, k_y, k_g, k_l, k_s = jax.random.split(key, 5)

    B, L, Cc, H, W = 2, 8, 4, 16, 16  # batch, latents(seq), channel, spatial

    # Distance matrix from random 1-D "camera positions" -> symmetric, zero diag.
    t = jax.random.uniform(k_t, (B, L), dtype=jnp.float32) * 4.0
    D = jnp.abs(t[:, :, None] - t[:, None, :])
    Y = jax.random.normal(k_y, (B, L, Cc, H, W), dtype=jnp.float32)

    # Deterministic parameter init (torch.randn(1) analogue).
    gamma2 = jax.random.normal(k_g, (1,), dtype=jnp.float32)
    ell = jax.random.normal(k_l, (1,), dtype=jnp.float32)
    sigma2 = jax.random.normal(k_s, (1,), dtype=jnp.float32)

    # tn=512 exercises the multi-tile path (grid = (B, 2) at N=1024);
    # production calls use the fat default tn=32768.
    Z = gplayer_forward(D, Y, gamma2, ell, sigma2, tn=512)
    Z = jax.block_until_ready(Z)

    Z_ref = jax.block_until_ready(_reference(D, Y, gamma2, ell, sigma2))
    assert Z.shape == (B, L, Cc * H * W)
    assert jnp.allclose(Z, Z_ref, rtol=1e-3, atol=1e-3), "mismatch vs reference"

    print("KERNEL_OK")
</pallas_src>

<mosaic_0001>
module attributes {stable_mosaic.version = 11 : i64} {
  func.func @_gplayer_kernel(%arg0: i32, %arg1: i32, %arg2: memref<1x8x8xf32, #tpu.memory_space<vmem>>, %arg3: memref<1x8x512xf32, #tpu.memory_space<vmem>>, %arg4: memref<1x8x512xf32, #tpu.memory_space<vmem>>) attributes {dimension_semantics = [#tpu.dimension_semantics<parallel>, #tpu.dimension_semantics<parallel>], iteration_bounds = array<i64: 2, 2>, scalar_prefetch = 0 : i64, scratch_operands = 0 : i64, tpu.core_type = #tpu.core_type<tc>, window_params = [{transform_indices = @transform_0, window_bounds = array<i64: 1, 8, 8>}, {transform_indices = @transform_1, window_bounds = array<i64: 1, 8, 512>}, {transform_indices = @transform_2, window_bounds = array<i64: 1, 8, 512>}]} {
    %c0 = arith.constant 0 : index
    %c0_0 = arith.constant 0 : index
    %c0_1 = arith.constant 0 : index
    %0 = vector.load %arg2[%c0, %c0_0, %c0_1] : memref<1x8x8xf32, #tpu.memory_space<vmem>>, vector<1x8x8xf32>
    %1 = vector.shape_cast %0 : vector<1x8x8xf32> to vector<8x8xf32>
    %c0_2 = arith.constant 0 : index
    %c0_3 = arith.constant 0 : index
    %c0_4 = arith.constant 0 : index
    %2 = vector.load %arg3[%c0_2, %c0_3, %c0_4] : memref<1x8x512xf32, #tpu.memory_space<vmem>>, vector<1x8x512xf32>
    %3 = vector.shape_cast %2 : vector<1x8x512xf32> to vector<8x512xf32>
    %cst = arith.constant dense<0.000000e+00> : vector<8x512xf32>
    %4 = tpu.matmul %1, %3, %cst {dimension_numbers = #tpu.dot_dimension_numbers<[1], [0], [0], [1], [0, 0, 1, 1], [], []>} : vector<8x8xf32>, vector<8x512xf32>, vector<8x512xf32> -> vector<8x512xf32>
    %cst_5 = arith.constant 0.000000e+00 : f32
    %5 = vector.broadcast %cst_5 : f32 to vector<8x512xf32>
    %6 = arith.maximumf %4, %5 : vector<8x512xf32>
    %c0_6 = arith.constant 0 : index
    %c0_7 = arith.constant 0 : index
    %c0_8 = arith.constant 0 : index
    %7 = vector.load %arg4[%c0_6, %c0_7, %c0_8] : memref<1x8x512xf32, #tpu.memory_space<vmem>>, vector<1x8x512xf32>
    %8 = vector.shape_cast %7 : vector<1x8x512xf32> to vector<8x512xf32>
    %9 = vector.shape_cast %6 : vector<8x512xf32> to vector<1x8x512xf32>
    tpu.vector_store %arg4[%c0_6, %c0_7, %c0_8], %9 {strides = array<i32>} : memref<1x8x512xf32, #tpu.memory_space<vmem>>, vector<1x8x512xf32>,
    return
  }
  func.func @transform_0(%arg0: i32, %arg1: i32) -> (i32, i32, i32) {
    %c0_i32 = arith.constant 0 : i32
    %c0_i32_0 = arith.constant 0 : i32
    %c0_i32_1 = arith.constant 0 : i32
    return %arg0, %c0_i32, %c0_i32_0 : i32, i32, i32
  }
  func.func @transform_1(%arg0: i32, %arg1: i32) -> (i32, i32, i32) {
    %c0_i32 = arith.constant 0 : i32
    %c0_i32_0 = arith.constant 0 : i32
    return %arg0, %c0_i32, %arg1 : i32, i32, i32
  }
  func.func @transform_2(%arg0: i32, %arg1: i32) -> (i32, i32, i32) {
    %c0_i32 = arith.constant 0 : i32
    %c0_i32_0 = arith.constant 0 : i32
    return %arg0, %c0_i32, %arg1 : i32, i32, i32
  }
}

</mosaic_0001>

<llo_original>
// kernel: tpu_custom_call.1
$region0: #{tpu_custom_call.1}
  #allocation0 [shape = 'u32[]', space=smem, size = 0x4, offset = 0x4, fixed_abs, tag = 'smem constant byte address 0x4 - core index']
  #allocation1 [shape = 'u32[144,128]{1,0:T(1,128)}', space=vmem, size = 0x12000, scoped, tag = 'internal scratch']
  %s0 = inlined_call_operand.hbm [shape: f32[2,8,8], index: 0, kind: input, shape index: {}]
  %s1 = inlined_call_operand.hbm [shape: f32[2,8,1024], index: 1, kind: input, shape index: {}]
  %s2 = inlined_call_operand.hbm [shape: f32[2,8,1024], index: 2, kind: output, shape index: {}]
  %s3 = sld [smem:[#allocation0]]
  $region49: #{tpu_custom_call.1} parent=0
    _
  %s5 = ssub.s32 1, %s3
  %s6 = scalar_select 0, %s5, %s3
  $region1: #{tpu_custom_call.1} parent=0
    #allocation2 [shape = 'u8[8192]{0}', space=vmem, size = 0x2000, scoped, tag = 'input window, operand 0']
    #allocation3 [shape = 's32[2]{0}', space=sflag, size = 0x8, scoped, tag = 'scoped memory for tpu_custom_call.1']
    #allocation4 [shape = 's32[2]{0}', space=sflag, size = 0x8, scoped, tag = 'scoped memory for tpu_custom_call.1']
    #allocation5 [shape = 'u8[32768]{0}', space=vmem, size = 0x8000, scoped, tag = 'input window, operand 1']
    #allocation6 [shape = 's32[2]{0}', space=sflag, size = 0x8, scoped, tag = 'scoped memory for tpu_custom_call.1']
    #allocation7 [shape = 'u8[32768]{0}', space=vmem, size = 0x8000, scoped, tag = 'output window, operand 0']
    %7 = vsyncpa [#allocation3], 0
    %s8 = scalar_lea.sflag [#allocation3], 1
    %9 = vsyncpa %s8, 0
    %10 = vsyncpa [#allocation6], 0
    %s11 = scalar_lea.sflag [#allocation6], 1
    %12 = vsyncpa %s11, 0
    %13 = vsyncpa [#allocation4], 0
    %s14 = scalar_lea.sflag [#allocation4], 1
    %15 = vsyncpa %s14, 0
    loop: start=0, step=1, limit=6
    $region2: #{tpu_custom_call.1} parent=1 // loop_pre_header
      _
    $region3: #{tpu_custom_call.1} parent=1 // loop_header
      %s17 = sphi 0, %s21
      %p18 = scmp.ge.s32.totalorder %s17, 6
      %s24 = sphi 0, %s36
      %s25 = sphi 0, %s32
      %s26 = sphi 0, %s24
      %s27 = sphi 0, %s25
      %s28 = sphi 0, %s26
      %s29 = sphi 0, %s27
      %s39 = sphi 0, %s41
      %s42 = sphi 0, %s39
      %s43 = sphi 0, %s42
      %s59 = sphi 0, %s43
      %s67 = sphi 0, %s69
      %s70 = sphi 0, %s67
      %s71 = sphi 0, %s70
      %s87 = sphi 0, %s71
      %s95 = sphi 0, %s97
      %s98 = sphi 0, %s95
      %s99 = sphi 0, %s98
      %s115 = sphi 0, %s99
    $region4: #{tpu_custom_call.1} parent=1 // loop_header_branch
      %20 = sbr.rel (%p18) target = $region8
    $region5: #{tpu_custom_call.1} parent=1 // loop_body
      %s22 = ssub.s32 %s17, 1
      %s23 = ssub.s32 %s17, 2
      %s30 = sadd.s32 1, %s25
      %p31 = scmp.ge.s32.totalorder %s30, 2
      %s32 = scalar_select %p31, 0, %s30
      %s33 = sadd.s32 1, %s24
      %s34 = scalar_select %p31, %s33, %s24
      %p35 = scmp.ge.s32.totalorder %s34, 2
      %s36 = scalar_select %p35, 0, %s34
      %s37 = ssub.s32 %s24, %s36
      %p38 = scmp.eq.s32.totalorder %s37, 0
      %s40 = sadd.s32 %s39, 1
      %s41 = scalar_select %p38, %s39, %s40
      %p44 = pneg %p38
      %p45 = scmp.eq.s32.totalorder %s17, 3
      %p46 = por %p44, %p45
      %p47 = scmp.ne.s32.totalorder %s39, %s42
      %p48 = scmp.eq.s32.totalorder %s17, 0
      %p49 = por %p47, %p48
      %p50 = scmp.ne.s32.totalorder %s39, %s42
      %p51 = scmp.eq.s32.totalorder %s22, 3
      %p52 = por %p50, %p51
      %p53 = scmp.ne.s32.totalorder %s42, %s43
      %p54 = scmp.eq.s32.totalorder %s22, 0
      %p55 = por %p53, %p54
      %p56 = scmp.ne.s32.totalorder %s42, %s43
      %p57 = scmp.eq.s32.totalorder %s23, 3
      %p58 = por %p56, %p57
      %p60 = scmp.ne.s32.totalorder %s43, %s59
      %p61 = scmp.eq.s32.totalorder %s23, 0
      %p62 = por %p60, %p61
      %s63 = ssub.s32 %s24, %s36
      %s64 = ssub.s32 %s25, %s32
      %s65 = sor.u32 %s63, %s64
      %p66 = scmp.eq.s32.totalorder %s65, 0
      %s68 = sadd.s32 %s67, 1
      %s69 = scalar_select %p66, %s67, %s68
      %p72 = pneg %p66
      %p73 = scmp.eq.s32.totalorder %s17, 3
      %p74 = por %p72, %p73
      %p75 = scmp.ne.s32.totalorder %s67, %s70
      %p76 = scmp.eq.s32.totalorder %s17, 0
      %p77 = por %p75, %p76
      %p78 = scmp.ne.s32.totalorder %s67, %s70
      %p79 = scmp.eq.s32.totalorder %s22, 3
      %p80 = por %p78, %p79
      %p81 = scmp.ne.s32.totalorder %s70, %s71
      %p82 = scmp.eq.s32.totalorder %s22, 0
      %p83 = por %p81, %p82
      %p84 = scmp.ne.s32.totalorder %s70, %s71
      %p85 = scmp.eq.s32.totalorder %s23, 3
      %p86 = por %p84, %p85
      %p88 = scmp.ne.s32.totalorder %s71, %s87
      %p89 = scmp.eq.s32.totalorder %s23, 0
      %p90 = por %p88, %p89
      %s91 = ssub.s32 %s24, %s36
      %s92 = ssub.s32 %s25, %s32
      %s93 = sor.u32 %s91, %s92
      %p94 = scmp.eq.s32.totalorder %s93, 0
      %s96 = sadd.s32 %s95, 1
      %s97 = scalar_select %p94, %s95, %s96
      %p100 = pneg %p94
      %p101 = scmp.eq.s32.totalorder %s17, 3
      %p102 = por %p100, %p101
      %p103 = scmp.ne.s32.totalorder %s95, %s98
      %p104 = scmp.eq.s32.totalorder %s17, 0
      %p105 = por %p103, %p104
      %p106 = scmp.ne.s32.totalorder %s95, %s98
      %p107 = scmp.eq.s32.totalorder %s22, 3
      %p108 = por %p106, %p107
      %p109 = scmp.ne.s32.totalorder %s98, %s99
      %p110 = scmp.eq.s32.totalorder %s22, 0
      %p111 = por %p109, %p110
      %p112 = scmp.ne.s32.totalorder %s98, %s99
      %p113 = scmp.eq.s32.totalorder %s23, 3
      %p114 = por %p112, %p113
      %p116 = scmp.ne.s32.totalorder %s99, %s115
      %p117 = scmp.eq.s32.totalorder %s23, 0
      %p118 = por %p116, %p117
      %p119 = scmp.le.s32.totalorder 1, %s17
      %p120 = scmp.lt.s32.totalorder %s17, 5
      %p121 = pnand %p119, %p120
      %p122 = pneg %p121
      // Predicated region
      $region9: #{tpu_custom_call.1} parent=5 // pred_check
        _
      $region10: #{tpu_custom_call.1} parent=5 // pred_check_branch
        %124 = sbr.rel (%p121) target = $region12
      $region11: #{tpu_custom_call.1} parent=5 // pred_region
        %s125 = ssub.s32 %s17, 1
      $region12: #{tpu_custom_call.1} parent=5 // pred_fallthru
        _
      %p126 = scmp.lt.s32.totalorder %s17, 4
      // Predicated region
      $region13: #{tpu_custom_call.1} parent=5 // pred_check
        %p127 = pneg %p126
      $region14: #{tpu_custom_call.1} parent=5 // pred_check_branch
        %129 = sbr.rel (%p127) target = $region16
      $region15: #{tpu_custom_call.1} parent=5 // pred_region
        // Predicated region
        $region17: #{tpu_custom_call.1} parent=15 // pred_check
          %p130 = pneg %p49
        $region18: #{tpu_custom_call.1} parent=15 // pred_check_branch
          %132 = sbr.rel (%p130) target = $region20
        $region19: #{tpu_custom_call.1} parent=15 // pred_region
          %s133 = sand.u32 %s39, 1
          %s134 = scalar_lea.sflag [#allocation3], %s133
          %s135 = sand.u32 %s39, 1
          %s136 = smul.addr %s135, 8
          %s137 = scalar_lea.vmem [#allocation2], %s136
          %s139 = ssub.s32 128, 128
          %140 = vsyncadd %s134, %s139
          %s141 = smul.addr %s24, 128
          %s142 = scalar_lea.hbm %s0, %s141
          %s144 = sshll.u32 %s137, 4
          %s145 = int_to_ptr.vmem [resolvable:$true] %s144
          %147 = dma.hbm_to_vmem [thread:$0]  %s142, 128, %s145, %s134
        $region20: #{tpu_custom_call.1} parent=15 // pred_fallthru
          _
        // Predicated region
        $region21: #{tpu_custom_call.1} parent=15 // pred_check
          %p148 = pneg %p77
        $region22: #{tpu_custom_call.1} parent=15 // pred_check_branch
          %150 = sbr.rel (%p148) target = $region24
        $region23: #{tpu_custom_call.1} parent=15 // pred_region
          %s151 = sand.u32 %s67, 1
          %s152 = scalar_lea.sflag [#allocation6], %s151
          %s153 = sand.u32 %s67, 1
          %s154 = smul.addr %s153, 32
          %s155 = scalar_lea.vmem [#allocation5], %s154
          %s156 = smul.u32 4, %s25
          %s158 = ssub.s32 512, 512
          %159 = vsyncadd %s152, %s158
          %s160 = smul.addr %s24, 8
          %s161 = sadd.s32 %s156, %s160
          %s162 = smul.addr %s161, 128
          %s163 = scalar_lea.hbm %s1, %s162
          %s165 = sshll.u32 %s155, 4
          %s166 = int_to_ptr.vmem [resolvable:$true] %s165
          %168 = dma.hbm_to_vmem [thread:$0]  %s163, 512, %s166, %s152
        $region24: #{tpu_custom_call.1} parent=15 // pred_fallthru
          _
      $region16: #{tpu_custom_call.1} parent=5 // pred_fallthru
        _
      %p169 = scmp.le.s32.totalorder 1, %s17
      %p170 = scmp.lt.s32.totalorder %s17, 5
      %p171 = pnand %p169, %p170
      %p172 = pneg %p171
      // Predicated region
      $region25: #{tpu_custom_call.1} parent=5 // pred_check
        _
      $region26: #{tpu_custom_call.1} parent=5 // pred_check_branch
        %174 = sbr.rel (%p171) target = $region28
      $region27: #{tpu_custom_call.1} parent=5 // pred_region
        %s175 = ssub.s32 %s17, 1
        %s176 = sand.u32 %s42, 1
        %s177 = scalar_lea.sflag [#allocation3], %s176
        %s178 = sand.u32 %s42, 1
        %s179 = smul.addr %s178, 8
        %s180 = scalar_lea.vmem [#allocation2], %s179
        // Predicated region
        $region29: #{tpu_custom_call.1} parent=27 // pred_check
          %p181 = pneg %p55
        $region30: #{tpu_custom_call.1} parent=27 // pred_check_branch
          %183 = sbr.rel (%p181) target = $region32
        $region31: #{tpu_custom_call.1} parent=27 // pred_region
          %184 = dma.done %s177, 128
        $region32: #{tpu_custom_call.1} parent=27 // pred_fallthru
          _
        %s185 = sand.u32 %s70, 1
        %s186 = scalar_lea.sflag [#allocation6], %s185
        %s187 = sand.u32 %s70, 1
        %s188 = smul.addr %s187, 32
        %s189 = scalar_lea.vmem [#allocation5], %s188
        // Predicated region
        $region33: #{tpu_custom_call.1} parent=27 // pred_check
          %p190 = pneg %p83
        $region34: #{tpu_custom_call.1} parent=27 // pred_check_branch
          %192 = sbr.rel (%p190) target = $region36
        $region35: #{tpu_custom_call.1} parent=27 // pred_region
          %193 = dma.done %s186, 512
        $region36: #{tpu_custom_call.1} parent=27 // pred_fallthru
          _
        %s194 = sand.u32 %s42, 1
        %s195 = scalar_lea.sflag [#allocation3], %s194
        %s196 = sand.u32 %s42, 1
        %s197 = smul.addr %s196, 8
        %s198 = scalar_lea.vmem [#allocation2], %s197
        %p199 = pneg %p55
        %p200 = pneg %p52
        %s201 = sand.u32 %s70, 1
        %s202 = scalar_lea.sflag [#allocation6], %s201
        %s203 = sand.u32 %s70, 1
        %s204 = smul.addr %s203, 32
        %s205 = scalar_lea.vmem [#allocation5], %s204
        %p206 = pneg %p83
        %p207 = pneg %p80
        %p208 = pneg %p111
        %p209 = pneg %p108
        %s210 = sand.u32 %s98, 1
        %s211 = scalar_lea.sflag [#allocation4], %s210
        %s212 = sand.u32 %s98, 1
        %s213 = smul.addr %s212, 32
        %s214 = scalar_lea.vmem [#allocation7], %s213
        %s215 = smul.u32 4, %s27
        %s216 = smul.u32 4, %s27
        %v217 = vld [vmem:[%s180] sm:$0xff]
        %v218 = vld [vmem:[%s189] sm:$0xff]
        %v219 = vld [vmem:[%s189 + $0x8] sm:$0xff]
        %v220 = vld [vmem:[%s189 + $0x10] sm:$0xff]
        %v221 = vld [vmem:[%s189 + $0x18] sm:$0xff]
        %vm222 = vcmask 64512
        %v224 = vsel %vm222, %v217, 0
        %226 = vmatprep.subr.mxu0 %v219
        %227 = vmatpush1.msra.mxu0 %v218
        %228 = vmatprep.subr.mxu0 0.0
        %229 = vmatpush1.msra.mxu0 0.0
        %230 = vmatprep.subr.mxu0 0.0
        %231 = vmatpush1.msra.mxu0 0.0
        %232 = vmatprep.subr.mxu0 0.0
        %233 = vmatpush1.msra.mxu0 0.0
        %234 = vmatprep.subr.mxu0 0.0
        %235 = vmatpush1.msra.mxu0 0.0
        %236 = vmatprep.subr.mxu0 0.0
        %237 = vmatpush1.msra.mxu0 0.0
        %238 = vmatprep.subr.mxu0 0.0
        %239 = vmatpush1.msra.mxu0 0.0
        %240 = vmatprep.subr.mxu0 0.0
        %241 = vmatpush1.msra.mxu0 0.0
        %242 = vmatprep.subr.mxu0 0.0
        %243 = vmatpush1.msra.mxu0 0.0
        %244 = vmatprep.subr.mxu0 0.0
        %245 = vmatpush1.msra.mxu0 0.0
        %246 = vmatprep.subr.mxu0 0.0
        %247 = vmatpush1.msra.mxu0 0.0
        %248 = vmatprep.subr.mxu0 0.0
        %249 = vmatpush1.msra.mxu0 0.0
        %250 = vmatprep.subr.mxu0 0.0
        %251 = vmatpush1.msra.mxu0 0.0
        %252 = vmatprep.subr.mxu0 0.0
        %253 = vmatpush1.msra.mxu0 0.0
        %254 = vmatprep.subr.mxu0 0.0
        %255 = vmatpush1.msra.mxu0 0.0
        %256 = vmatprep.subr.mxu0 0.0
        %257 = vmatpush1.msra.mxu0 0.0
        %258 = vmatprep.subr.mxu0 0.0
        %259 = vmatpush1.msra.mxu0 0.0
        %260 = vmatprep.subr.mxu0 0.0
        %261 = vmatpush1.msra.mxu0 0.0
        %262 = vmatprep.subr.mxu0 0.0
        %263 = vmatpush1.msra.mxu0 0.0
        %264 = vmatprep.subr.mxu0 0.0
        %265 = vmatpush1.msra.mxu0 0.0
        %266 = vmatprep.subr.mxu0 0.0
        %267 = vmatpush1.msra.mxu0 0.0
        %268 = vmatprep.subr.mxu0 0.0
        %269 = vmatpush1.msra.mxu0 0.0
        %270 = vmatprep.subr.mxu0 0.0
        %271 = vmatpush1.msra.mxu0 0.0
        %272 = vmatprep.subr.mxu0 0.0
        %273 = vmatpush1.msra.mxu0 0.0
        %274 = vmatprep.subr.mxu0 0.0
        %275 = vmatpush1.msra.mxu0 0.0
        %276 = vmatprep.subr.mxu0 0.0
        %277 = vmatpush1.msra.mxu0 0.0
        %278 = vmatprep.subr.mxu0 0.0
        %279 = vmatpush1.msra.mxu0 0.0
        %280 = vmatprep.subr.mxu0 0.0
        %281 = vmatpush1.msra.mxu0 0.0
        %282 = vmatprep.subr.mxu0 0.0
        %283 = vmatpush1.msra.mxu0 0.0
        %284 = vmatprep.subr.mxu0 0.0
        %285 = vmatpush1.msra.mxu0 0.0
        %286 = vmatprep.subr.mxu0 0.0
        %287 = vmatpush1.msra.mxu0 0.0
        %288 = vmatprep.subr.mxu0 0.0
        %289 = vmatpush1.msra.mxu0 0.0
        %290 = vmatprep.mubr.f32.mxu0 0.0
        %291 = vmatmul.mubr.f32.gmra.mrb[0].mxu0 %v224
        %v292 = vpop.f32.mrb[0].mxu0
        %v293 = vadd.f32 0.0, %v292
        %v294 = vpop.f32.mrb[0].mxu0
        %v295 = vadd.f32 0.0, %v294
        %296 = vdwg.mxu0
        %297 = vmatprep.subr.mxu0 %v221
        %298 = vmatpush1.msra.mxu0 %v220
        %299 = vmatprep.subr.mxu0 0.0
        %300 = vmatpush1.msra.mxu0 0.0
        %301 = vmatprep.subr.mxu0 0.0
        %302 = vmatpush1.msra.mxu0 0.0
        %303 = vmatprep.subr.mxu0 0.0
        %304 = vmatpush1.msra.mxu0 0.0
        %305 = vmatprep.subr.mxu0 0.0
        %306 = vmatpush1.msra.mxu0 0.0
        %307 = vmatprep.subr.mxu0 0.0
        %308 = vmatpush1.msra.mxu0 0.0
        %309 = vmatprep.subr.mxu0 0.0
        %310 = vmatpush1.msra.mxu0 0.0
        %311 = vmatprep.subr.mxu0 0.0
        %312 = vmatpush1.msra.mxu0 0.0
        %313 = vmatprep.subr.mxu0 0.0
        %314 = vmatpush1.msra.mxu0 0.0
        %315 = vmatprep.subr.mxu0 0.0
        %316 = vmatpush1.msra.mxu0 0.0
        %317 = vmatprep.subr.mxu0 0.0
        %318 = vmatpush1.msra.mxu0 0.0
        %319 = vmatprep.subr.mxu0 0.0
        %320 = vmatpush1.msra.mxu0 0.0
        %321 = vmatprep.subr.mxu0 0.0
        %322 = vmatpush1.msra.mxu0 0.0
        %323 = vmatprep.subr.mxu0 0.0
        %324 = vmatpush1.msra.mxu0 0.0
        %325 = vmatprep.subr.mxu0 0.0
        %326 = vmatpush1.msra.mxu0 0.0
        %327 = vmatprep.subr.mxu0 0.0
        %328 = vmatpush1.msra.mxu0 0.0
        %329 = vmatprep.subr.mxu0 0.0
        %330 = vmatpush1.msra.mxu0 0.0
        %331 = vmatprep.subr.mxu0 0.0
        %332 = vmatpush1.msra.mxu0 0.0
        %333 = vmatprep.subr.mxu0 0.0
        %334 = vmatpush1.msra.mxu0 0.0
        %335 = vmatprep.subr.mxu0 0.0
        %336 = vmatpush1.msra.mxu0 0.0
        %337 = vmatprep.subr.mxu0 0.0
        %338 = vmatpush1.msra.mxu0 0.0
        %339 = vmatprep.subr.mxu0 0.0
        %340 = vmatpush1.msra.mxu0 0.0
        %341 = vmatprep.subr.mxu0 0.0
        %342 = vmatpush1.msra.mxu0 0.0
        %343 = vmatprep.subr.mxu0 0.0
        %344 = vmatpush1.msra.mxu0 0.0
        %345 = vmatprep.subr.mxu0 0.0
        %346 = vmatpush1.msra.mxu0 0.0
        %347 = vmatprep.subr.mxu0 0.0
        %348 = vmatpush1.msra.mxu0 0.0
        %349 = vmatprep.subr.mxu0 0.0
        %350 = vmatpush1.msra.mxu0 0.0
        %351 = vmatprep.subr.mxu0 0.0
        %352 = vmatpush1.msra.mxu0 0.0
        %353 = vmatprep.subr.mxu0 0.0
        %354 = vmatpush1.msra.mxu0 0.0
        %355 = vmatprep.subr.mxu0 0.0
        %356 = vmatpush1.msra.mxu0 0.0
        %357 = vmatprep.subr.mxu0 0.0
        %358 = vmatpush1.msra.mxu0 0.0
        %359 = vmatprep.subr.mxu0 0.0
        %360 = vmatpush1.msra.mxu0 0.0
        %361 = vmatprep.mubr.f32.mxu0 0.0
        %362 = vmatmul.mubr.f32.gmra.mrb[0].mxu0 %v224
        %v363 = vpop.f32.mrb[0].mxu0
        %v364 = vadd.f32 0.0, %v363
        %v365 = vpop.f32.mrb[0].mxu0
        %v366 = vadd.f32 0.0, %v365
        %367 = vdwg.mxu0
        %v368 = vmax.f32 %v293, 0.0
        %v369 = vmax.f32 %v295, 0.0
        %v370 = vmax.f32 %v364, 0.0
        %v371 = vmax.f32 %v366, 0.0
        %372 = vst [vmem:[%s214] sm:$0xff] %v368
        %373 = vst [vmem:[%s214 + $0x8] sm:$0xff] %v369
        %374 = vst [vmem:[%s214 + $0x10] sm:$0xff] %v370
        %375 = vst [vmem:[%s214 + $0x18] sm:$0xff] %v371
        %s376 = sand.u32 %s98, 1
        %s377 = scalar_lea.sflag [#allocation4], %s376
        %s378 = sand.u32 %s98, 1
        %s379 = smul.addr %s378, 32
        %s380 = scalar_lea.vmem [#allocation7], %s379
        // Predicated region
        $region37: #{tpu_custom_call.1} parent=27 // pred_check
          %p381 = pneg %p108
        $region38: #{tpu_custom_call.1} parent=27 // pred_check_branch
          %383 = sbr.rel (%p381) target = $region40
        $region39: #{tpu_custom_call.1} parent=27 // pred_region
          %s384 = smul.u32 4, %s27
          %s386 = ssub.s32 512, 512
          %387 = vsyncadd %s377, %s386
          %s388 = smul.addr %s26, 8
          %s389 = sadd.s32 %s384, %s388
          %s390 = smul.addr %s389, 128
          %s391 = scalar_lea.hbm %s2, %s390
          %s393 = sshll.u32 %s380, 4
          %s394 = int_to_ptr.vmem [resolvable:$true] %s393
          %396 = dma.vmem_to_hbm [thread:$0]  %s394, 512, %s391, %s377
        $region40: #{tpu_custom_call.1} parent=27 // pred_fallthru
          _
      $region28: #{tpu_custom_call.1} parent=5 // pred_fallthru
        _
      %p397 = scmp.le.s32.totalorder 2, %s17
      // Predicated region
      $region41: #{tpu_custom_call.1} parent=5 // pred_check
        %p398 = pneg %p397
      $region42: #{tpu_custom_call.1} parent=5 // pred_check_branch
        %400 = sbr.rel (%p398) target = $region44
      $region43: #{tpu_custom_call.1} parent=5 // pred_region
        %s401 = ssub.s32 %s17, 2
        // Predicated region
        $region45: #{tpu_custom_call.1} parent=43 // pred_check
          %p402 = pneg %p114
        $region46: #{tpu_custom_call.1} parent=43 // pred_check_branch
          %404 = sbr.rel (%p402) target = $region48
        $region47: #{tpu_custom_call.1} parent=43 // pred_region
          %s405 = sand.u32 %s99, 1
          %s406 = scalar_lea.sflag [#allocation4], %s405
          %s407 = sand.u32 %s99, 1
          %s408 = smul.addr %s407, 32
          %s409 = scalar_lea.vmem [#allocation7], %s408
          %410 = dma.done %s406, 512
        $region48: #{tpu_custom_call.1} parent=43 // pred_fallthru
          _
      $region44: #{tpu_custom_call.1} parent=5 // pred_fallthru
        _
    $region6: #{tpu_custom_call.1} parent=1 // loop_footer
      %s21 = sadd.s32 1, %s17
    $region7: #{tpu_custom_call.1} parent=1 // loop_footer_branch
      %16 = sbr.rel target = $region3
    $region8: #{tpu_custom_call.1} parent=1 // loop_exit
      _
    %411 = vsyncpa [#allocation3], 1
    %s412 = scalar_lea.sflag [#allocation3], 1
    %413 = vsyncpa %s412, 1
    %414 = vsyncpa [#allocation6], 1
    %s415 = scalar_lea.sflag [#allocation6], 1
    %416 = vsyncpa %s415, 1
    %417 = vsyncpa [#allocation4], 1
    %s418 = scalar_lea.sflag [#allocation4], 1
    %419 = vsyncpa %s418, 1

</llo_original>
